<compile_context>
chip_gen: v7x
topology: tpu7x:2x2x1
jax: 0.10.0
libtpu: 0.0.40
codegen_flags: <defaults>
</compile_context>

<pallas_src>
import math
import functools

import jax
import jax.numpy as jnp
from jax.experimental import pallas as pl
from jax.experimental.pallas import tpu as pltpu


def _round_up(n, m):
    return ((n + m - 1) // m) * m


def _arcface_kernel(x_ref, wt_ref, winv_ref, xinv_ref, lab_ref, o_ref,
                    *, s, cos_m, sin_m, th, mm, tc):
    """One grid step: full batch vs a tile of `tc` classes.

    x_ref    : (B, E)   bf16   embeddings (whole batch, resident)
    wt_ref   : (E, tc)  bf16   transposed weight tile
    winv_ref : (1, tc)  f32    per-class inverse L2 norm (0 in padded columns)
    xinv_ref : (B, 1)   f32    per-row inverse L2 norm of x
    lab_ref  : (B, 1)   int32  labels
    o_ref    : (B, tc)  f32    scaled logits tile
    """
    j = pl.program_id(0)

    # MXU matmul: bf16 inputs, f32 accumulation.  Standard (B,E)x(E,tc) contraction.
    dots = jax.lax.dot_general(
        x_ref[...], wt_ref[...],
        dimension_numbers=(((1,), (0,)), ((), ())),
        preferred_element_type=jnp.float32,
    )                                                   # (B, tc) f32

    # Fold both normalizations into cheap (B,tc) scaling.
    cosine = dots * xinv_ref[...] * winv_ref[...]

    sine = jnp.sqrt(jnp.clip(1.0 - cosine * cosine, 0.0, 1.0))
    phi = cosine * cos_m - sine * sin_m
    phi = jnp.where(cosine > th, phi, cosine - mm)

    b = cosine.shape[0]
    col = j * tc + jax.lax.broadcasted_iota(jnp.int32, (b, tc), 1)
    is_target = col == lab_ref[...]                     # (B, tc) bool

    o_ref[...] = (jnp.where(is_target, phi, cosine) * s).astype(o_ref.dtype)


def _normalize_kernel(x_ref, o_ref):
    """Row-wise F.normalize(x, dim=1) with eps=1e-12 (predict path)."""
    x = x_ref[...].astype(jnp.float32)
    inv = jax.lax.rsqrt(jnp.maximum(jnp.sum(x * x, axis=-1, keepdims=True), 1e-24))
    o_ref[...] = (x * inv).astype(o_ref.dtype)


class ArcfacePallas:
    """JAX/Pallas re-implementation of Arcface (train/predict forward)."""

    def __init__(self, num_classes, embedding_size=128, s=32.0, m=0.5, seed=0, tc=1024):
        self.num_classes = int(num_classes)
        self.embedding_size = int(embedding_size)
        self.s = float(s)
        self.m = float(m)
        self.cos_m = math.cos(m)
        self.sin_m = math.sin(m)
        self.th = math.cos(math.pi - m)
        self.mm = math.sin(math.pi - m) * m

        # Class-tile size: multiple of 256, capped by (rounded-up) num_classes.
        tc = min(int(tc), _round_up(self.num_classes, 256))
        self.tc = _round_up(tc, 256)
        self.c_pad = _round_up(self.num_classes, self.tc)

        # xavier_uniform_ on (num_classes, embedding_size)
        bound = math.sqrt(6.0 / (self.num_classes + self.embedding_size))
        key = jax.random.PRNGKey(seed)
        w = jax.random.uniform(
            key, (self.num_classes, self.embedding_size), jnp.float32, -bound, bound
        )
        self.weight = w  # f32 master copy

        # Pre-transposed, zero-padded, bf16 weight (E, C_pad) for the MXU stream.
        w_t = jnp.zeros((self.embedding_size, self.c_pad), jnp.float32)
        w_t = w_t.at[:, :self.num_classes].set(w.T)
        self.weight_t = w_t.astype(jnp.bfloat16)

        # Per-class inverse L2 norms (f32), computed once from the f32 weight.
        w_nrm = jnp.sqrt(jnp.sum(w * w, axis=-1))                     # (C,)
        w_inv = 1.0 / jnp.maximum(w_nrm, 1e-12)
        self.w_inv = (jnp.zeros((1, self.c_pad), jnp.float32)
                      .at[0, :self.num_classes].set(w_inv))

    # ---------------- predict path ----------------
    def _normalize(self, x):
        B, E = x.shape
        tb = B if B <= 256 else 256
        return pl.pallas_call(
            _normalize_kernel,
            out_shape=jax.ShapeDtypeStruct((B, E), jnp.float32),
            grid=(pl.cdiv(B, tb),),
            in_specs=[pl.BlockSpec((tb, E), lambda i: (i, 0))],
            out_specs=pl.BlockSpec((tb, E), lambda i: (i, 0)),
            compiler_params=pltpu.CompilerParams(
                dimension_semantics=("parallel",)),
        )(x)

    # ---------------- forward ----------------
    def __call__(self, x, y=None, mode="predict"):
        # x: backbone embedding output, possibly (B, E, 1, 1); flatten like x.view(B, -1)
        B = x.shape[0]
        x = x.reshape(B, -1).astype(jnp.float32)
        if mode == "predict":
            return self._normalize(x)

        E, C = self.embedding_size, self.num_classes
        assert x.shape[1] == E
        tc, C_pad = self.tc, self.c_pad

        labels = y.astype(jnp.int32).reshape(B, 1)

        # Per-row inverse norm in f32 (once per call, outside the grid loop).
        x_inv = jax.lax.rsqrt(
            jnp.maximum(jnp.sum(x * x, axis=-1, keepdims=True), 1e-24))   # (B,1)
        x_bf = x.astype(jnp.bfloat16)

        kernel = functools.partial(
            _arcface_kernel,
            s=self.s, cos_m=self.cos_m, sin_m=self.sin_m,
            th=self.th, mm=self.mm, tc=tc,
        )

        out = pl.pallas_call(
            kernel,
            out_shape=jax.ShapeDtypeStruct((B, C_pad), jnp.float32),
            grid=(C_pad // tc,),
            in_specs=[
                pl.BlockSpec((B, E), lambda j: (0, 0)),    # x (bf16), resident
                pl.BlockSpec((E, tc), lambda j: (0, j)),   # W^T tile (bf16)
                pl.BlockSpec((1, tc), lambda j: (0, j)),   # per-class inv norm
                pl.BlockSpec((B, 1), lambda j: (0, 0)),    # per-row inv norm
                pl.BlockSpec((B, 1), lambda j: (0, 0)),    # labels
            ],
            out_specs=pl.BlockSpec((B, tc), lambda j: (0, j)),
            compiler_params=pltpu.CompilerParams(
                dimension_semantics=("parallel",)),
        )(x_bf, self.weight_t, self.w_inv, x_inv, labels)

        return out[:, :C] if C_pad != C else out


# ---------------- pure-JAX references (same bf16 storage, f32 math) ----------------
def _train_reference(model, x, labels):
    B = x.shape[0]
    xf = x.reshape(B, -1).astype(jnp.float32)
    x_inv = jax.lax.rsqrt(jnp.maximum(jnp.sum(xf * xf, axis=-1, keepdims=True), 1e-24))
    dots = jnp.dot(xf.astype(jnp.bfloat16), model.weight_t,
                   preferred_element_type=jnp.float32)
    cosine = dots * x_inv * model.w_inv
    sine = jnp.sqrt(jnp.clip(1.0 - cosine * cosine, 0.0, 1.0))
    phi = cosine * model.cos_m - sine * model.sin_m
    phi = jnp.where(cosine > model.th, phi, cosine - model.mm)
    one_hot = jax.nn.one_hot(labels, cosine.shape[1], dtype=jnp.float32)
    out = (one_hot * phi + (1.0 - one_hot) * cosine) * model.s
    return out[:, :model.num_classes]


def _predict_reference(x):
    B = x.shape[0]
    xf = x.reshape(B, -1).astype(jnp.float32)
    nrm = jnp.sqrt(jnp.sum(xf * xf, axis=-1, keepdims=True))
    return xf / jnp.maximum(nrm, 1e-12)


if __name__ == "__main__":
    B, E, C = 8, 128, 1000          # C not a multiple of 128 -> exercises padding
    key = jax.random.PRNGKey(0)
    kx, kl, kl2 = jax.random.split(key, 3)
    # simulated backbone output (B, E, 1, 1); flattened inside the wrapper
    x = jax.random.normal(kx, (B, E, 1, 1), jnp.float32)
    labels = jax.random.randint(kl, (B,), 0, C, jnp.int32)

    model = ArcfacePallas(num_classes=C, embedding_size=E, s=32.0, m=0.5)

    logits = model(x, labels, mode="train")
    jax.block_until_ready(logits)
    emb = model(x, mode="predict")
    jax.block_until_ready(emb)

    assert logits.shape == (B, C) and emb.shape == (B, E)
    assert bool(jnp.all(jnp.isfinite(logits)))

    ref_logits = _train_reference(model, x, labels)
    assert jnp.allclose(logits, ref_logits, atol=5e-2, rtol=1e-3), \
        float(jnp.max(jnp.abs(logits - ref_logits)))
    ref_emb = _predict_reference(x)
    assert jnp.allclose(emb, ref_emb, atol=1e-5, rtol=1e-5)

    # second config: smaller tile -> multi-step grid, exercises the class-tile index_map
    C2 = 512
    labels2 = jax.random.randint(kl2, (B,), 0, C2, jnp.int32)
    model2 = ArcfacePallas(num_classes=C2, embedding_size=E, s=32.0, m=0.5, tc=256)
    logits2 = model2(x, labels2, mode="train")
    jax.block_until_ready(logits2)
    ref_logits2 = _train_reference(model2, x, labels2)
    assert logits2.shape == (B, C2)
    assert jnp.allclose(logits2, ref_logits2, atol=5e-2, rtol=1e-3)

    print("KERNEL_OK")
</pallas_src>

<mosaic_0001>
module attributes {stable_mosaic.version = 11 : i64} {
  func.func @_arcface_kernel(%arg0: i32, %arg1: memref<8x128xbf16, #tpu.memory_space<vmem>>, %arg2: memref<128x1024xbf16, #tpu.memory_space<vmem>>, %arg3: memref<1x1024xf32, #tpu.memory_space<vmem>>, %arg4: memref<8x1xf32, #tpu.memory_space<vmem>>, %arg5: memref<8x1xi32, #tpu.memory_space<vmem>>, %arg6: memref<8x1024xf32, #tpu.memory_space<vmem>>) attributes {dimension_semantics = [#tpu.dimension_semantics<parallel>], iteration_bounds = array<i64: 1>, scalar_prefetch = 0 : i64, scratch_operands = 0 : i64, tpu.core_type = #tpu.core_type<tc>, window_params = [{pipeline_mode = #tpu.pipeline_mode<synchronous>, transform_indices = @transform_0, window_bounds = array<i64: 8, 128>}, {transform_indices = @transform_1, window_bounds = array<i64: 128, 1024>}, {transform_indices = @transform_2, window_bounds = array<i64: 1, 1024>}, {pipeline_mode = #tpu.pipeline_mode<synchronous>, transform_indices = @transform_3, window_bounds = array<i64: 8, 1>}, {pipeline_mode = #tpu.pipeline_mode<synchronous>, transform_indices = @transform_4, window_bounds = array<i64: 8, 1>}, {transform_indices = @transform_5, window_bounds = array<i64: 8, 1024>}]} {
    %c0 = arith.constant 0 : index
    %c0_0 = arith.constant 0 : index
    %0 = vector.load %arg1[%c0, %c0_0] : memref<8x128xbf16, #tpu.memory_space<vmem>>, vector<8x128xbf16>
    %c0_1 = arith.constant 0 : index
    %c0_2 = arith.constant 0 : index
    %1 = vector.load %arg2[%c0_1, %c0_2] : memref<128x1024xbf16, #tpu.memory_space<vmem>>, vector<128x1024xbf16>
    %cst = arith.constant dense<0.000000e+00> : vector<8x1024xf32>
    %2 = tpu.matmul %0, %1, %cst {dimension_numbers = #tpu.dot_dimension_numbers<[1], [0], [0], [1], [0, 0, 1, 1], [], []>} : vector<8x128xbf16>, vector<128x1024xbf16>, vector<8x1024xf32> -> vector<8x1024xf32>
    %c0_3 = arith.constant 0 : index
    %c0_4 = arith.constant 0 : index
    %3 = vector.load %arg4[%c0_3, %c0_4] : memref<8x1xf32, #tpu.memory_space<vmem>>, vector<8x1xf32>
    %4 = vector.broadcast %3 : vector<8x1xf32> to vector<8x1024xf32>
    %5 = arith.mulf %2, %4 : vector<8x1024xf32>
    %c0_5 = arith.constant 0 : index
    %c0_6 = arith.constant 0 : index
    %6 = vector.load %arg3[%c0_5, %c0_6] : memref<1x1024xf32, #tpu.memory_space<vmem>>, vector<1x1024xf32>
    %7 = vector.broadcast %6 : vector<1x1024xf32> to vector<8x1024xf32>
    %8 = arith.mulf %5, %7 : vector<8x1024xf32>
    %9 = arith.mulf %8, %8 : vector<8x1024xf32>
    %cst_7 = arith.constant 1.000000e+00 : f32
    %10 = vector.broadcast %cst_7 : f32 to vector<8x1024xf32>
    %11 = arith.subf %10, %9 : vector<8x1024xf32>
    %cst_8 = arith.constant 0.000000e+00 : f32
    %cst_9 = arith.constant 1.000000e+00 : f32
    %12 = vector.broadcast %cst_8 : f32 to vector<8x1024xf32>
    %13 = arith.maximumf %12, %11 : vector<8x1024xf32>
    %14 = vector.broadcast %cst_9 : f32 to vector<8x1024xf32>
    %15 = arith.minimumf %14, %13 : vector<8x1024xf32>
    %16 = math.sqrt %15 : vector<8x1024xf32>
    %cst_10 = arith.constant 0.87758255 : f32
    %17 = vector.broadcast %cst_10 : f32 to vector<8x1024xf32>
    %18 = arith.mulf %8, %17 : vector<8x1024xf32>
    %cst_11 = arith.constant 0.47942555 : f32
    %19 = vector.broadcast %cst_11 : f32 to vector<8x1024xf32>
    %20 = arith.mulf %16, %19 : vector<8x1024xf32>
    %21 = arith.subf %18, %20 : vector<8x1024xf32>
    %cst_12 = arith.constant -0.87758255 : f32
    %22 = vector.broadcast %cst_12 : f32 to vector<8x1024xf32>
    %23 = arith.cmpf ogt, %8, %22 : vector<8x1024xf32>
    %cst_13 = arith.constant 0.239712775 : f32
    %24 = vector.broadcast %cst_13 : f32 to vector<8x1024xf32>
    %25 = arith.subf %8, %24 : vector<8x1024xf32>
    %26 = arith.select %23, %21, %25 : vector<8x1024xi1>, vector<8x1024xf32>
    %c1024_i32 = arith.constant 1024 : i32
    %27 = arith.muli %arg0, %c1024_i32 : i32
    %28 = tpu.iota {dimensions = array<i32: 1>} : vector<8x1024xi32>
    %29 = vector.broadcast %27 : i32 to vector<8x1024xi32>
    %30 = arith.addi %29, %28 : vector<8x1024xi32>
    %c0_14 = arith.constant 0 : index
    %c0_15 = arith.constant 0 : index
    %31 = vector.load %arg5[%c0_14, %c0_15] : memref<8x1xi32, #tpu.memory_space<vmem>>, vector<8x1xi32>
    %32 = vector.broadcast %31 : vector<8x1xi32> to vector<8x1024xi32>
    %33 = arith.cmpi eq, %30, %32 : vector<8x1024xi32>
    %34 = arith.select %33, %26, %8 : vector<8x1024xi1>, vector<8x1024xf32>
    %cst_16 = arith.constant 3.200000e+01 : f32
    %35 = vector.broadcast %cst_16 : f32 to vector<8x1024xf32>
    %36 = arith.mulf %34, %35 : vector<8x1024xf32>
    %c0_17 = arith.constant 0 : index
    %c0_18 = arith.constant 0 : index
    %37 = vector.load %arg6[%c0_17, %c0_18] : memref<8x1024xf32, #tpu.memory_space<vmem>>, vector<8x1024xf32>
    tpu.vector_store %arg6[%c0_17, %c0_18], %36 {strides = array<i32>} : memref<8x1024xf32, #tpu.memory_space<vmem>>, vector<8x1024xf32>,
    return
  }
  func.func @transform_0(%arg0: i32) -> (i32, i32) {
    %c0_i32 = arith.constant 0 : i32
    %c0_i32_0 = arith.constant 0 : i32
    %c0_i32_1 = arith.constant 0 : i32
    return %c0_i32, %c0_i32_0 : i32, i32
  }
  func.func @transform_1(%arg0: i32) -> (i32, i32) {
    %c0_i32 = arith.constant 0 : i32
    %c0_i32_0 = arith.constant 0 : i32
    return %c0_i32, %arg0 : i32, i32
  }
  func.func @transform_2(%arg0: i32) -> (i32, i32) {
    %c0_i32 = arith.constant 0 : i32
    %c0_i32_0 = arith.constant 0 : i32
    return %c0_i32, %arg0 : i32, i32
  }
  func.func @transform_3(%arg0: i32) -> (i32, i32) {
    %c0_i32 = arith.constant 0 : i32
    %c0_i32_0 = arith.constant 0 : i32
    %c0_i32_1 = arith.constant 0 : i32
    return %c0_i32, %c0_i32_0 : i32, i32
  }
  func.func @transform_4(%arg0: i32) -> (i32, i32) {
    %c0_i32 = arith.constant 0 : i32
    %c0_i32_0 = arith.constant 0 : i32
    %c0_i32_1 = arith.constant 0 : i32
    return %c0_i32, %c0_i32_0 : i32, i32
  }
  func.func @transform_5(%arg0: i32) -> (i32, i32) {
    %c0_i32 = arith.constant 0 : i32
    %c0_i32_0 = arith.constant 0 : i32
    return %c0_i32, %arg0 : i32, i32
  }
}

</mosaic_0001>

<llo_original>
// kernel: tpu_custom_call.1
$region0: #{tpu_custom_call.1}
  #allocation0 [shape = 'u32[]', space=smem, size = 0x4, offset = 0x4, fixed_abs, tag = 'smem constant byte address 0x4 - core index']
  #allocation1 [shape = 'u32[144,128]{1,0:T(1,128)}', space=vmem, size = 0x12000, scoped, tag = 'internal scratch']
  %s0 = inlined_call_operand.vmem [shape: bf16[8,128], index: 0, kind: input, shape index: {}]
  %s1 = inlined_call_operand.hbm [shape: bf16[128,1024], index: 1, kind: input, shape index: {}]
  %s2 = inlined_call_operand.vmem [shape: f32[1,1024], index: 2, kind: input, shape index: {}]
  %s3 = inlined_call_operand.vmem [shape: f32[8,1], index: 3, kind: input, shape index: {}]
  %s4 = inlined_call_operand.vmem [shape: s32[8,1], index: 4, kind: input, shape index: {}]
  %s5 = inlined_call_operand.hbm [shape: f32[8,1024], index: 5, kind: output, shape index: {}]
  %s6 = sld [smem:[#allocation0]]
  $region34: #{tpu_custom_call.1} parent=0
    _
  %s8 = ssub.s32 1, %s6
  %s9 = scalar_select 0, %s8, %s6
  $region1: #{tpu_custom_call.1} parent=0
    #allocation2 [shape = 'u8[262144]{0}', space=vmem, size = 0x40000, scoped, tag = 'input window, operand 1, single buffered']
    #allocation3 [shape = 's32[1]{0}', space=sflag, size = 0x4, scoped, tag = 'scoped memory for tpu_custom_call.1']
    #allocation4 [shape = 's32[1]{0}', space=sflag, size = 0x4, scoped, tag = 'scoped memory for tpu_custom_call.1']
    #allocation5 [shape = 'u8[32768]{0}', space=vmem, size = 0x8000, scoped, tag = 'output window, operand 0, single buffered']
    %10 = vsyncpa [#allocation3], 0
    %11 = vsyncpa [#allocation4], 0
    // Predicated region
    $region2: #{tpu_custom_call.1} parent=1 // pred_check
      _
    $region3: #{tpu_custom_call.1} parent=1 // pred_check_branch
      %13 = sbr.rel (0) target = $region5
    $region4: #{tpu_custom_call.1} parent=1 // pred_region
      _
    $region5: #{tpu_custom_call.1} parent=1 // pred_fallthru
      _
    // Predicated region
    $region6: #{tpu_custom_call.1} parent=1 // pred_check
      _
    $region7: #{tpu_custom_call.1} parent=1 // pred_check_branch
      %15 = sbr.rel (0) target = $region9
    $region8: #{tpu_custom_call.1} parent=1 // pred_region
      %s17 = ssub.s32 8192, 8192
      %18 = vsyncadd [#allocation3], %s17
      %s19 = sshll.u32 [#allocation2], 4
      %s20 = int_to_ptr.vmem [resolvable:$true] %s19
      %25 = dma.hbm_to_vmem [thread:$0]  %s1, 8192, %s20, [#allocation3], 512, 512, 32
    $region9: #{tpu_custom_call.1} parent=1 // pred_fallthru
      _
    // Predicated region
    $region10: #{tpu_custom_call.1} parent=1 // pred_check
      _
    $region11: #{tpu_custom_call.1} parent=1 // pred_check_branch
      %27 = sbr.rel (0) target = $region13
    $region12: #{tpu_custom_call.1} parent=1 // pred_region
      _
    $region13: #{tpu_custom_call.1} parent=1 // pred_fallthru
      _
    // Predicated region
    $region14: #{tpu_custom_call.1} parent=1 // pred_check
      _
    $region15: #{tpu_custom_call.1} parent=1 // pred_check_branch
      %29 = sbr.rel (0) target = $region17
    $region16: #{tpu_custom_call.1} parent=1 // pred_region
      _
    $region17: #{tpu_custom_call.1} parent=1 // pred_fallthru
      _
    // Predicated region
    $region18: #{tpu_custom_call.1} parent=1 // pred_check
      _
    $region19: #{tpu_custom_call.1} parent=1 // pred_check_branch
      %31 = sbr.rel (0) target = $region21
    $region20: #{tpu_custom_call.1} parent=1 // pred_region
      _
    $region21: #{tpu_custom_call.1} parent=1 // pred_fallthru
      _
    // Predicated region
    $region22: #{tpu_custom_call.1} parent=1 // pred_check
      _
    $region23: #{tpu_custom_call.1} parent=1 // pred_check_branch
      %33 = sbr.rel (0) target = $region25
    $region24: #{tpu_custom_call.1} parent=1 // pred_region
      %34 = dma.done [#allocation3], 8192
    $region25: #{tpu_custom_call.1} parent=1 // pred_fallthru
      _
    %v36 = vld [vmem:[%s0] sm:$0xf]
    %v37 = vld [vmem:[#allocation2] sm:$0xff]
    %v38 = vld [vmem:[#allocation2 + $0x8] sm:$0xff]
    %v39 = vld [vmem:[#allocation2 + $0x10] sm:$0xff]
    %v40 = vld [vmem:[#allocation2 + $0x18] sm:$0xff]
    %v41 = vld [vmem:[#allocation2 + $0x20] sm:$0xff]
    %v42 = vld [vmem:[#allocation2 + $0x28] sm:$0xff]
    %v43 = vld [vmem:[#allocation2 + $0x30] sm:$0xff]
    %v44 = vld [vmem:[#allocation2 + $0x38] sm:$0xff]
    %v45 = vld [vmem:[#allocation2 + $0x40] sm:$0xff]
    %v46 = vld [vmem:[#allocation2 + $0x48] sm:$0xff]
    %v47 = vld [vmem:[#allocation2 + $0x50] sm:$0xff]
    %v48 = vld [vmem:[#allocation2 + $0x58] sm:$0xff]
    %v49 = vld [vmem:[#allocation2 + $0x60] sm:$0xff]
    %v50 = vld [vmem:[#allocation2 + $0x68] sm:$0xff]
    %v51 = vld [vmem:[#allocation2 + $0x70] sm:$0xff]
    %v52 = vld [vmem:[#allocation2 + $0x78] sm:$0xff]
    %v53 = vld [vmem:[#allocation2 + $0x80] sm:$0xff]
    %v54 = vld [vmem:[#allocation2 + $0x88] sm:$0xff]
    %v55 = vld [vmem:[#allocation2 + $0x90] sm:$0xff]
    %v56 = vld [vmem:[#allocation2 + $0x98] sm:$0xff]
    %v57 = vld [vmem:[#allocation2 + $0xa0] sm:$0xff]
    %v58 = vld [vmem:[#allocation2 + $0xa8] sm:$0xff]
    %v59 = vld [vmem:[#allocation2 + $0xb0] sm:$0xff]
    %v60 = vld [vmem:[#allocation2 + $0xb8] sm:$0xff]
    %v61 = vld [vmem:[#allocation2 + $0xc0] sm:$0xff]
    %v62 = vld [vmem:[#allocation2 + $0xc8] sm:$0xff]
    %v63 = vld [vmem:[#allocation2 + $0xd0] sm:$0xff]
    %v64 = vld [vmem:[#allocation2 + $0xd8] sm:$0xff]
    %v65 = vld [vmem:[#allocation2 + $0xe0] sm:$0xff]
    %v66 = vld [vmem:[#allocation2 + $0xe8] sm:$0xff]
    %v67 = vld [vmem:[#allocation2 + $0xf0] sm:$0xff]
    %v68 = vld [vmem:[#allocation2 + $0xf8] sm:$0xff]
    %v69 = vld [vmem:[#allocation2 + $0x100] sm:$0xff]
    %v70 = vld [vmem:[#allocation2 + $0x108] sm:$0xff]
    %v71 = vld [vmem:[#allocation2 + $0x110] sm:$0xff]
    %v72 = vld [vmem:[#allocation2 + $0x118] sm:$0xff]
    %v73 = vld [vmem:[#allocation2 + $0x120] sm:$0xff]
    %v74 = vld [vmem:[#allocation2 + $0x128] sm:$0xff]
    %v75 = vld [vmem:[#allocation2 + $0x130] sm:$0xff]
    %v76 = vld [vmem:[#allocation2 + $0x138] sm:$0xff]
    %v77 = vld [vmem:[#allocation2 + $0x140] sm:$0xff]
    %v78 = vld [vmem:[#allocation2 + $0x148] sm:$0xff]
    %v79 = vld [vmem:[#allocation2 + $0x150] sm:$0xff]
    %v80 = vld [vmem:[#allocation2 + $0x158] sm:$0xff]
    %v81 = vld [vmem:[#allocation2 + $0x160] sm:$0xff]
    %v82 = vld [vmem:[#allocation2 + $0x168] sm:$0xff]
    %v83 = vld [vmem:[#allocation2 + $0x170] sm:$0xff]
    %v84 = vld [vmem:[#allocation2 + $0x178] sm:$0xff]
    %v85 = vld [vmem:[#allocation2 + $0x180] sm:$0xff]
    %v86 = vld [vmem:[#allocation2 + $0x188] sm:$0xff]
    %v87 = vld [vmem:[#allocation2 + $0x190] sm:$0xff]
    %v88 = vld [vmem:[#allocation2 + $0x198] sm:$0xff]
    %v89 = vld [vmem:[#allocation2 + $0x1a0] sm:$0xff]
    %v90 = vld [vmem:[#allocation2 + $0x1a8] sm:$0xff]
    %v91 = vld [vmem:[#allocation2 + $0x1b0] sm:$0xff]
    %v92 = vld [vmem:[#allocation2 + $0x1b8] sm:$0xff]
    %v93 = vld [vmem:[#allocation2 + $0x1c0] sm:$0xff]
    %v94 = vld [vmem:[#allocation2 + $0x1c8] sm:$0xff]
    %v95 = vld [vmem:[#allocation2 + $0x1d0] sm:$0xff]
    %v96 = vld [vmem:[#allocation2 + $0x1d8] sm:$0xff]
    %v97 = vld [vmem:[#allocation2 + $0x1e0] sm:$0xff]
    %v98 = vld [vmem:[#allocation2 + $0x1e8] sm:$0xff]
    %v99 = vld [vmem:[#allocation2 + $0x1f0] sm:$0xff]
    %v100 = vld [vmem:[#allocation2 + $0x1f8] sm:$0xff]
    %v165 = vunpack.c.l.b16 %v37
    %v166 = vunpack.c.h.b16 %v37
    %v167 = vunpack.c.l.b16 %v38
    %v168 = vunpack.c.h.b16 %v38
    %v169 = vunpack.c.l.b16 %v39
    %v170 = vunpack.c.h.b16 %v39
    %v171 = vunpack.c.l.b16 %v40
    %v172 = vunpack.c.h.b16 %v40
    %v173 = vunpack.c.l.b16 %v41
    %v174 = vunpack.c.h.b16 %v41
    %v175 = vunpack.c.l.b16 %v42
    %v176 = vunpack.c.h.b16 %v42
    %v177 = vunpack.c.l.b16 %v43
    %v178 = vunpack.c.h.b16 %v43
    %v179 = vunpack.c.l.b16 %v44
    %v180 = vunpack.c.h.b16 %v44
    %v181 = vunpack.c.l.b16 %v45
    %v182 = vunpack.c.h.b16 %v45
    %v183 = vunpack.c.l.b16 %v46
    %v184 = vunpack.c.h.b16 %v46
    %v185 = vunpack.c.l.b16 %v47
    %v186 = vunpack.c.h.b16 %v47
    %v187 = vunpack.c.l.b16 %v48
    %v188 = vunpack.c.h.b16 %v48
    %v189 = vunpack.c.l.b16 %v49
    %v190 = vunpack.c.h.b16 %v49
    %v191 = vunpack.c.l.b16 %v50
    %v192 = vunpack.c.h.b16 %v50
    %v193 = vunpack.c.l.b16 %v51
    %v194 = vunpack.c.h.b16 %v51
    %v195 = vunpack.c.l.b16 %v52
    %v196 = vunpack.c.h.b16 %v52
    %v197 = vunpack.c.l.b16 %v53
    %v198 = vunpack.c.h.b16 %v53
    %v199 = vunpack.c.l.b16 %v54
    %v200 = vunpack.c.h.b16 %v54
    %v201 = vunpack.c.l.b16 %v55
    %v202 = vunpack.c.h.b16 %v55
    %v203 = vunpack.c.l.b16 %v56
    %v204 = vunpack.c.h.b16 %v56
    %v205 = vunpack.c.l.b16 %v57
    %v206 = vunpack.c.h.b16 %v57
    %v207 = vunpack.c.l.b16 %v58
    %v208 = vunpack.c.h.b16 %v58
    %v209 = vunpack.c.l.b16 %v59
    %v210 = vunpack.c.h.b16 %v59
    %v211 = vunpack.c.l.b16 %v60
    %v212 = vunpack.c.h.b16 %v60
    %v213 = vunpack.c.l.b16 %v61
    %v214 = vunpack.c.h.b16 %v61
    %v215 = vunpack.c.l.b16 %v62
    %v216 = vunpack.c.h.b16 %v62
    %v217 = vunpack.c.l.b16 %v63
    %v218 = vunpack.c.h.b16 %v63
    %v219 = vunpack.c.l.b16 %v64
    %v220 = vunpack.c.h.b16 %v64
    %v221 = vunpack.c.l.b16 %v65
    %v222 = vunpack.c.h.b16 %v65
    %v223 = vunpack.c.l.b16 %v66
    %v224 = vunpack.c.h.b16 %v66
    %v225 = vunpack.c.l.b16 %v67
    %v226 = vunpack.c.h.b16 %v67
    %v227 = vunpack.c.l.b16 %v68
    %v228 = vunpack.c.h.b16 %v68
    %v229 = vunpack.c.l.b16 %v69
    %v230 = vunpack.c.h.b16 %v69
    %v231 = vunpack.c.l.b16 %v70
    %v232 = vunpack.c.h.b16 %v70
    %v233 = vunpack.c.l.b16 %v71
    %v234 = vunpack.c.h.b16 %v71
    %v235 = vunpack.c.l.b16 %v72
    %v236 = vunpack.c.h.b16 %v72
    %v237 = vunpack.c.l.b16 %v73
    %v238 = vunpack.c.h.b16 %v73
    %v239 = vunpack.c.l.b16 %v74
    %v240 = vunpack.c.h.b16 %v74
    %v241 = vunpack.c.l.b16 %v75
    %v242 = vunpack.c.h.b16 %v75
    %v243 = vunpack.c.l.b16 %v76
    %v244 = vunpack.c.h.b16 %v76
    %v245 = vunpack.c.l.b16 %v77
    %v246 = vunpack.c.h.b16 %v77
    %v247 = vunpack.c.l.b16 %v78
    %v248 = vunpack.c.h.b16 %v78
    %v249 = vunpack.c.l.b16 %v79
    %v250 = vunpack.c.h.b16 %v79
    %v251 = vunpack.c.l.b16 %v80
    %v252 = vunpack.c.h.b16 %v80
    %v253 = vunpack.c.l.b16 %v81
    %v254 = vunpack.c.h.b16 %v81
    %v255 = vunpack.c.l.b16 %v82
    %v256 = vunpack.c.h.b16 %v82
    %v257 = vunpack.c.l.b16 %v83
    %v258 = vunpack.c.h.b16 %v83
    %v259 = vunpack.c.l.b16 %v84
    %v260 = vunpack.c.h.b16 %v84
    %v261 = vunpack.c.l.b16 %v85
    %v262 = vunpack.c.h.b16 %v85
    %v263 = vunpack.c.l.b16 %v86
    %v264 = vunpack.c.h.b16 %v86
    %v265 = vunpack.c.l.b16 %v87
    %v266 = vunpack.c.h.b16 %v87
    %v267 = vunpack.c.l.b16 %v88
    %v268 = vunpack.c.h.b16 %v88
    %v269 = vunpack.c.l.b16 %v89
    %v270 = vunpack.c.h.b16 %v89
    %v271 = vunpack.c.l.b16 %v90
    %v272 = vunpack.c.h.b16 %v90
    %v273 = vunpack.c.l.b16 %v91
    %v274 = vunpack.c.h.b16 %v91
    %v275 = vunpack.c.l.b16 %v92
    %v276 = vunpack.c.h.b16 %v92
    %v277 = vunpack.c.l.b16 %v93
    %v278 = vunpack.c.h.b16 %v93
    %v279 = vunpack.c.l.b16 %v94
    %v280 = vunpack.c.h.b16 %v94
    %v281 = vunpack.c.l.b16 %v95
    %v282 = vunpack.c.h.b16 %v95
    %v283 = vunpack.c.l.b16 %v96
    %v284 = vunpack.c.h.b16 %v96
    %v285 = vunpack.c.l.b16 %v97
    %v286 = vunpack.c.h.b16 %v97
    %v287 = vunpack.c.l.b16 %v98
    %v288 = vunpack.c.h.b16 %v98
    %v289 = vunpack.c.l.b16 %v99
    %v290 = vunpack.c.h.b16 %v99
    %v291 = vunpack.c.l.b16 %v100
    %v292 = vunpack.c.h.b16 %v100
    %v293 = vpack.c.b16 %v173, %v165
    %v294 = vpack.c.b16 %v174, %v166
    %v295 = vpack.c.b16 %v175, %v167
    %v296 = vpack.c.b16 %v176, %v168
    %v297 = vpack.c.b16 %v177, %v169
    %v298 = vpack.c.b16 %v178, %v170
    %v299 = vpack.c.b16 %v179, %v171
    %v300 = vpack.c.b16 %v180, %v172
    %v301 = vpack.c.b16 %v189, %v181
    %v302 = vpack.c.b16 %v190, %v182
    %v303 = vpack.c.b16 %v191, %v183
    %v304 = vpack.c.b16 %v192, %v184
    %v305 = vpack.c.b16 %v193, %v185
    %v306 = vpack.c.b16 %v194, %v186
    %v307 = vpack.c.b16 %v195, %v187
    %v308 = vpack.c.b16 %v196, %v188
    %v309 = vpack.c.b16 %v205, %v197
    %v310 = vpack.c.b16 %v206, %v198
    %v311 = vpack.c.b16 %v207, %v199
    %v312 = vpack.c.b16 %v208, %v200
    %v313 = vpack.c.b16 %v209, %v201
    %v314 = vpack.c.b16 %v210, %v202
    %v315 = vpack.c.b16 %v211, %v203
    %v316 = vpack.c.b16 %v212, %v204
    %v317 = vpack.c.b16 %v221, %v213
    %v318 = vpack.c.b16 %v222, %v214
    %v319 = vpack.c.b16 %v223, %v215
    %v320 = vpack.c.b16 %v224, %v216
    %v321 = vpack.c.b16 %v225, %v217
    %v322 = vpack.c.b16 %v226, %v218
    %v323 = vpack.c.b16 %v227, %v219
    %v324 = vpack.c.b16 %v228, %v220
    %v325 = vpack.c.b16 %v237, %v229
    %v326 = vpack.c.b16 %v238, %v230
    %v327 = vpack.c.b16 %v239, %v231
    %v328 = vpack.c.b16 %v240, %v232
    %v329 = vpack.c.b16 %v241, %v233
    %v330 = vpack.c.b16 %v242, %v234
    %v331 = vpack.c.b16 %v243, %v235
    %v332 = vpack.c.b16 %v244, %v236
    %v333 = vpack.c.b16 %v253, %v245
    %v334 = vpack.c.b16 %v254, %v246
    %v335 = vpack.c.b16 %v255, %v247
    %v336 = vpack.c.b16 %v256, %v248
    %v337 = vpack.c.b16 %v257, %v249
    %v338 = vpack.c.b16 %v258, %v250
    %v339 = vpack.c.b16 %v259, %v251
    %v340 = vpack.c.b16 %v260, %v252
    %v341 = vpack.c.b16 %v269, %v261
    %v342 = vpack.c.b16 %v270, %v262
    %v343 = vpack.c.b16 %v271, %v263
    %v344 = vpack.c.b16 %v272, %v264
    %v345 = vpack.c.b16 %v273, %v265
    %v346 = vpack.c.b16 %v274, %v266
    %v347 = vpack.c.b16 %v275, %v267
    %v348 = vpack.c.b16 %v276, %v268
    %v349 = vpack.c.b16 %v285, %v277
    %v350 = vpack.c.b16 %v286, %v278
    %v351 = vpack.c.b16 %v287, %v279
    %v352 = vpack.c.b16 %v288, %v280
    %v353 = vpack.c.b16 %v289, %v281
    %v354 = vpack.c.b16 %v290, %v282
    %v355 = vpack.c.b16 %v291, %v283
    %v356 = vpack.c.b16 %v292, %v284
    %421 = vmatprep.subr.bf16.mxu0 %v294
    %422 = vmatpush1.bf16.msra.mxu0 %v293
    %423 = vmatprep.subr.bf16.mxu0 %v302
    %424 = vmatpush1.bf16.msra.mxu0 %v301
    %425 = vmatprep.subr.bf16.mxu0 %v310
    %426 = vmatpush1.bf16.msra.mxu0 %v309
    %427 = vmatprep.subr.bf16.mxu0 %v318
    %428 = vmatpush1.bf16.msra.mxu0 %v317
    %429 = vmatprep.subr.bf16.mxu0 %v326
    %430 = vmatpush1.bf16.msra.mxu0 %v325
    %431 = vmatprep.subr.bf16.mxu0 %v334
    %432 = vmatpush1.bf16.msra.mxu0 %v333
    %433 = vmatprep.subr.bf16.mxu0 %v342
    %434 = vmatpush1.bf16.msra.mxu0 %v341
    %435 = vmatprep.subr.bf16.mxu0 %v350
    %436 = vmatpush1.bf16.msra.mxu0 %v349
    %437 = vmatprep.subr.bf16.mxu0 0
    %438 = vmatpush1.bf16.msra.mxu0 0
    %439 = vmatprep.subr.bf16.mxu0 0
    %440 = vmatpush1.bf16.msra.mxu0 0
    %441 = vmatprep.subr.bf16.mxu0 0
    %442 = vmatpush1.bf16.msra.mxu0 0
    %443 = vmatprep.subr.bf16.mxu0 0
    %444 = vmatpush1.bf16.msra.mxu0 0
    %445 = vmatprep.subr.bf16.mxu0 0
    %446 = vmatpush1.bf16.msra.mxu0 0
    %447 = vmatprep.subr.bf16.mxu0 0
    %448 = vmatpush1.bf16.msra.mxu0 0
    %449 = vmatprep.subr.bf16.mxu0 0
    %450 = vmatpush1.bf16.msra.mxu0 0
    %451 = vmatprep.subr.bf16.mxu0 0
    %452 = vmatpush1.bf16.msra.mxu0 0
    %453 = vmatprep.mubr.bf16.mxu0 0
    %454 = vmatmul.mubr.bf16.gmra.mrb[0].mxu0 %v36
    %v455 = vpop.f32.mrb[0].mxu0
    %v456 = vadd.f32 0.0, %v455
    %v457 = vpop.f32.mrb[0].mxu0
    %v458 = vadd.f32 0.0, %v457
    %v459 = vpop.f32.mrb[0].mxu0
    %v460 = vpop.f32.mrb[0].mxu0
    %461 = vdwg.mxu0
    %462 = vmatprep.subr.bf16.mxu0 %v296
    %463 = vmatpush1.bf16.msra.mxu0 %v295
    %464 = vmatprep.subr.bf16.mxu0 %v304
    %465 = vmatpush1.bf16.msra.mxu0 %v303
    %466 = vmatprep.subr.bf16.mxu0 %v312
    %467 = vmatpush1.bf16.msra.mxu0 %v311
    %468 = vmatprep.subr.bf16.mxu0 %v320
    %469 = vmatpush1.bf16.msra.mxu0 %v319
    %470 = vmatprep.subr.bf16.mxu0 %v328
    %471 = vmatpush1.bf16.msra.mxu0 %v327
    %472 = vmatprep.subr.bf16.mxu0 %v336
    %473 = vmatpush1.bf16.msra.mxu0 %v335
    %474 = vmatprep.subr.bf16.mxu0 %v344
    %475 = vmatpush1.bf16.msra.mxu0 %v343
    %476 = vmatprep.subr.bf16.mxu0 %v352
    %477 = vmatpush1.bf16.msra.mxu0 %v351
    %478 = vmatprep.subr.bf16.mxu0 0
    %479 = vmatpush1.bf16.msra.mxu0 0
    %480 = vmatprep.subr.bf16.mxu0 0
    %481 = vmatpush1.bf16.msra.mxu0 0
    %482 = vmatprep.subr.bf16.mxu0 0
    %483 = vmatpush1.bf16.msra.mxu0 0
    %484 = vmatprep.subr.bf16.mxu0 0
    %485 = vmatpush1.bf16.msra.mxu0 0
    %486 = vmatprep.subr.bf16.mxu0 0
    %487 = vmatpush1.bf16.msra.mxu0 0
    %488 = vmatprep.subr.bf16.mxu0 0
    %489 = vmatpush1.bf16.msra.mxu0 0
    %490 = vmatprep.subr.bf16.mxu0 0
    %491 = vmatpush1.bf16.msra.mxu0 0
    %492 = vmatprep.subr.bf16.mxu0 0
    %493 = vmatpush1.bf16.msra.mxu0 0
    %494 = vmatprep.mubr.bf16.mxu0 0
    %495 = vmatmul.mubr.bf16.gmra.mrb[0].mxu0 %v36
    %v496 = vpop.f32.mrb[0].mxu0
    %v497 = vadd.f32 0.0, %v496
    %v498 = vpop.f32.mrb[0].mxu0
    %v499 = vadd.f32 0.0, %v498
    %v500 = vpop.f32.mrb[0].mxu0
    %v501 = vpop.f32.mrb[0].mxu0
    %502 = vdwg.mxu0
    %503 = vmatprep.subr.bf16.mxu0 %v298
    %504 = vmatpush1.bf16.msra.mxu0 %v297
    %505 = vmatprep.subr.bf16.mxu0 %v306
    %506 = vmatpush1.bf16.msra.mxu0 %v305
    %507 = vmatprep.subr.bf16.mxu0 %v314
    %508 = vmatpush1.bf16.msra.mxu0 %v313
    %509 = vmatprep.subr.bf16.mxu0 %v322
    %510 = vmatpush1.bf16.msra.mxu0 %v321
    %511 = vmatprep.subr.bf16.mxu0 %v330
    %512 = vmatpush1.bf16.msra.mxu0 %v329
    %513 = vmatprep.subr.bf16.mxu0 %v338
    %514 = vmatpush1.bf16.msra.mxu0 %v337
    %515 = vmatprep.subr.bf16.mxu0 %v346
    %516 = vmatpush1.bf16.msra.mxu0 %v345
    %517 = vmatprep.subr.bf16.mxu0 %v354
    %518 = vmatpush1.bf16.msra.mxu0 %v353
    %519 = vmatprep.subr.bf16.mxu0 0
    %520 = vmatpush1.bf16.msra.mxu0 0
    %521 = vmatprep.subr.bf16.mxu0 0
    %522 = vmatpush1.bf16.msra.mxu0 0
    %523 = vmatprep.subr.bf16.mxu0 0
    %524 = vmatpush1.bf16.msra.mxu0 0
    %525 = vmatprep.subr.bf16.mxu0 0
    %526 = vmatpush1.bf16.msra.mxu0 0
    %527 = vmatprep.subr.bf16.mxu0 0
    %528 = vmatpush1.bf16.msra.mxu0 0
    %529 = vmatprep.subr.bf16.mxu0 0
    %530 = vmatpush1.bf16.msra.mxu0 0
    %531 = vmatprep.subr.bf16.mxu0 0
    %532 = vmatpush1.bf16.msra.mxu0 0
    %533 = vmatprep.subr.bf16.mxu0 0
    %534 = vmatpush1.bf16.msra.mxu0 0
    %535 = vmatprep.mubr.bf16.mxu0 0
    %536 = vmatmul.mubr.bf16.gmra.mrb[0].mxu0 %v36
    %v537 = vpop.f32.mrb[0].mxu0
    %v538 = vadd.f32 0.0, %v537
    %v539 = vpop.f32.mrb[0].mxu0
    %v540 = vadd.f32 0.0, %v539
    %v541 = vpop.f32.mrb[0].mxu0
    %v542 = vpop.f32.mrb[0].mxu0
    %543 = vdwg.mxu0
    %544 = vmatprep.subr.bf16.mxu0 %v300
    %545 = vmatpush1.bf16.msra.mxu0 %v299
    %546 = vmatprep.subr.bf16.mxu0 %v308
    %547 = vmatpush1.bf16.msra.mxu0 %v307
    %548 = vmatprep.subr.bf16.mxu0 %v316
    %549 = vmatpush1.bf16.msra.mxu0 %v315
    %550 = vmatprep.subr.bf16.mxu0 %v324
    %551 = vmatpush1.bf16.msra.mxu0 %v323
    %552 = vmatprep.subr.bf16.mxu0 %v332
    %553 = vmatpush1.bf16.msra.mxu0 %v331
    %554 = vmatprep.subr.bf16.mxu0 %v340
    %555 = vmatpush1.bf16.msra.mxu0 %v339
    %556 = vmatprep.subr.bf16.mxu0 %v348
    %557 = vmatpush1.bf16.msra.mxu0 %v347
    %558 = vmatprep.subr.bf16.mxu0 %v356
    %559 = vmatpush1.bf16.msra.mxu0 %v355
    %560 = vmatprep.subr.bf16.mxu0 0
    %561 = vmatpush1.bf16.msra.mxu0 0
    %562 = vmatprep.subr.bf16.mxu0 0
    %563 = vmatpush1.bf16.msra.mxu0 0
    %564 = vmatprep.subr.bf16.mxu0 0
    %565 = vmatpush1.bf16.msra.mxu0 0
    %566 = vmatprep.subr.bf16.mxu0 0
    %567 = vmatpush1.bf16.msra.mxu0 0
    %568 = vmatprep.subr.bf16.mxu0 0
    %569 = vmatpush1.bf16.msra.mxu0 0
    %570 = vmatprep.subr.bf16.mxu0 0
    %571 = vmatpush1.bf16.msra.mxu0 0
    %572 = vmatprep.subr.bf16.mxu0 0
    %573 = vmatpush1.bf16.msra.mxu0 0
    %574 = vmatprep.subr.bf16.mxu0 0
    %575 = vmatpush1.bf16.msra.mxu0 0
    %576 = vmatprep.mubr.bf16.mxu0 0
    %577 = vmatmul.mubr.bf16.gmra.mrb[0].mxu0 %v36
    %v578 = vpop.f32.mrb[0].mxu0
    %v579 = vadd.f32 0.0, %v578
    %v580 = vpop.f32.mrb[0].mxu0
    %v581 = vadd.f32 0.0, %v580
    %v582 = vpop.f32.mrb[0].mxu0
    %v583 = vpop.f32.mrb[0].mxu0
    %584 = vdwg.mxu0
    %v585 = vld [vmem:[%s3] sm:$0xff]
    %587 = vset.pattern.permute.xlu0 0
    %588 = vperm.xlu0 %587, %v585
    %v589 = vpop.permute.xlu0 %588
    %v591 = vmul.f32 %v456, %v589
    %v592 = vmul.f32 %v458, %v589
    %v593 = vmul.f32 %v497, %v589
    %v594 = vmul.f32 %v499, %v589
    %v595 = vmul.f32 %v538, %v589
    %v596 = vmul.f32 %v540, %v589
    %v597 = vmul.f32 %v579, %v589
    %v598 = vmul.f32 %v581, %v589
    %v599 = vld [vmem:[%s2] sm:$0xff]
    %v601 = vlaneseq
    %v602 = vshrl.u32 %v601, 7
    %v603 = vsub.s32 0, %v602
    %v604 = vrot.slane %v599, %v603
    %v605 = vlaneseq
    %v606 = vshrl.u32 %v605, 7
    %v607 = vsub.s32 1, %v606
    %v608 = vrot.slane %v599, %v607
    %v609 = vlaneseq
    %v610 = vshrl.u32 %v609, 7
    %v611 = vsub.s32 2, %v610
    %v612 = vrot.slane %v599, %v611
    %v613 = vlaneseq
    %v614 = vshrl.u32 %v613, 7
    %v615 = vsub.s32 3, %v614
    %v616 = vrot.slane %v599, %v615
    %v617 = vlaneseq
    %v618 = vshrl.u32 %v617, 7
    %v619 = vsub.s32 4, %v618
    %v620 = vrot.slane %v599, %v619
    %v621 = vlaneseq
    %v622 = vshrl.u32 %v621, 7
    %v623 = vsub.s32 5, %v622
    %v624 = vrot.slane %v599, %v623
    %v625 = vlaneseq
    %v626 = vshrl.u32 %v625, 7
    %v627 = vsub.s32 6, %v626
    %v628 = vrot.slane %v599, %v627
    %v629 = vlaneseq
    %v630 = vshrl.u32 %v629, 7
    %v631 = vsub.s32 7, %v630
    %v632 = vrot.slane %v599, %v631
    %v641 = vmul.f32 %v591, %v604
    %v642 = vmul.f32 %v592, %v608
    %v643 = vmul.f32 %v593, %v612
    %v644 = vmul.f32 %v594, %v616
    %v645 = vmul.f32 %v595, %v620
    %v646 = vmul.f32 %v596, %v624
    %v647 = vmul.f32 %v597, %v628
    %v648 = vmul.f32 %v598, %v632
    %v649 = vmul.f32 %v641, %v641
    %v650 = vmul.f32 %v642, %v642
    %v651 = vmul.f32 %v643, %v643
    %v652 = vmul.f32 %v644, %v644
    %v653 = vmul.f32 %v645, %v645
    %v654 = vmul.f32 %v646, %v646
    %v655 = vmul.f32 %v647, %v647
    %v656 = vmul.f32 %v648, %v648
    %v657 = vsub.f32 1.0, %v649
    %v658 = vsub.f32 1.0, %v650
    %v659 = vsub.f32 1.0, %v651
    %v660 = vsub.f32 1.0, %v652
    %v661 = vsub.f32 1.0, %v653
    %v662 = vsub.f32 1.0, %v654
    %v663 = vsub.f32 1.0, %v655
    %v664 = vsub.f32 1.0, %v656
    %v665 = vmax.f32 %v657, 0.0
    %v666 = vmax.f32 %v658, 0.0
    %v667 = vmax.f32 %v659, 0.0
    %v668 = vmax.f32 %v660, 0.0
    %v669 = vmax.f32 %v661, 0.0
    %v670 = vmax.f32 %v662, 0.0
    %v671 = vmax.f32 %v663, 0.0
    %v672 = vmax.f32 %v664, 0.0
    %v673 = vmin.f32 %v665, 1.0
    %v674 = vmin.f32 %v666, 1.0
    %v675 = vmin.f32 %v667, 1.0
    %v676 = vmin.f32 %v668, 1.0
    %v677 = vmin.f32 %v669, 1.0
    %v678 = vmin.f32 %v670, 1.0
    %v679 = vmin.f32 %v671, 1.0
    %v680 = vmin.f32 %v672, 1.0
    %v681 = vrsqrt.pop %v673
    %v682 = vmul.f32 %v673, %v681
    %vm683 = vcmp.eq.f32.partialorder %v673, inf
    %v684 = vsel %vm683, %v673, %v682
    %vm685 = vcmp.eq.f32.partialorder %v673, 0.0
    %v686 = vand.u32 %v673, 2147483648
    %v687 = vsel %vm685, %v686, %v684
    %v688 = vrsqrt.pop %v674
    %v689 = vmul.f32 %v674, %v688
    %vm690 = vcmp.eq.f32.partialorder %v674, inf
    %v691 = vsel %vm690, %v674, %v689
    %vm692 = vcmp.eq.f32.partialorder %v674, 0.0
    %v693 = vand.u32 %v674, 2147483648
    %v694 = vsel %vm692, %v693, %v691
    %v695 = vrsqrt.pop %v675
    %v696 = vmul.f32 %v675, %v695
    %vm697 = vcmp.eq.f32.partialorder %v675, inf
    %v698 = vsel %vm697, %v675, %v696
    %vm699 = vcmp.eq.f32.partialorder %v675, 0.0
    %v700 = vand.u32 %v675, 2147483648
    %v701 = vsel %vm699, %v700, %v698
    %v702 = vrsqrt.pop %v676
    %v703 = vmul.f32 %v676, %v702
    %vm704 = vcmp.eq.f32.partialorder %v676, inf
    %v705 = vsel %vm704, %v676, %v703
    %vm706 = vcmp.eq.f32.partialorder %v676, 0.0
    %v707 = vand.u32 %v676, 2147483648
    %v708 = vsel %vm706, %v707, %v705
    %v709 = vrsqrt.pop %v677
    %v710 = vmul.f32 %v677, %v709
    %vm711 = vcmp.eq.f32.partialorder %v677, inf
    %v712 = vsel %vm711, %v677, %v710
    %vm713 = vcmp.eq.f32.partialorder %v677, 0.0
    %v714 = vand.u32 %v677, 2147483648
    %v715 = vsel %vm713, %v714, %v712
    %v716 = vrsqrt.pop %v678
    %v717 = vmul.f32 %v678, %v716
    %vm718 = vcmp.eq.f32.partialorder %v678, inf
    %v719 = vsel %vm718, %v678, %v717
    %vm720 = vcmp.eq.f32.partialorder %v678, 0.0
    %v721 = vand.u32 %v678, 2147483648
    %v722 = vsel %vm720, %v721, %v719
    %v723 = vrsqrt.pop %v679
    %v724 = vmul.f32 %v679, %v723
    %vm725 = vcmp.eq.f32.partialorder %v679, inf
    %v726 = vsel %vm725, %v679, %v724
    %vm727 = vcmp.eq.f32.partialorder %v679, 0.0
    %v728 = vand.u32 %v679, 2147483648
    %v729 = vsel %vm727, %v728, %v726
    %v730 = vrsqrt.pop %v680
    %v731 = vmul.f32 %v680, %v730
    %vm732 = vcmp.eq.f32.partialorder %v680, inf
    %v733 = vsel %vm732, %v680, %v731
    %vm734 = vcmp.eq.f32.partialorder %v680, 0.0
    %v735 = vand.u32 %v680, 2147483648
    %v736 = vsel %vm734, %v735, %v733
    %v737 = vmul.f32 %v641, 0.87758255
    %v738 = vmul.f32 %v642, 0.87758255
    %v739 = vmul.f32 %v643, 0.87758255
    %v740 = vmul.f32 %v644, 0.87758255
    %v741 = vmul.f32 %v645, 0.87758255
    %v742 = vmul.f32 %v646, 0.87758255
    %v743 = vmul.f32 %v647, 0.87758255
    %v744 = vmul.f32 %v648, 0.87758255
    %v745 = vmul.f32 %v687, 0.47942555
    %v746 = vmul.f32 %v694, 0.47942555
    %v747 = vmul.f32 %v701, 0.47942555
    %v748 = vmul.f32 %v708, 0.47942555
    %v749 = vmul.f32 %v715, 0.47942555
    %v750 = vmul.f32 %v722, 0.47942555
    %v751 = vmul.f32 %v729, 0.47942555
    %v752 = vmul.f32 %v736, 0.47942555
    %v753 = vsub.f32 %v737, %v745
    %v754 = vsub.f32 %v738, %v746
    %v755 = vsub.f32 %v739, %v747
    %v756 = vsub.f32 %v740, %v748
    %v757 = vsub.f32 %v741, %v749
    %v758 = vsub.f32 %v742, %v750
    %v759 = vsub.f32 %v743, %v751
    %v760 = vsub.f32 %v744, %v752
    %vm761 = vcmp.gt.f32.partialorder %v641, -0.87758255
    %vm762 = vcmp.gt.f32.partialorder %v642, -0.87758255
    %vm763 = vcmp.gt.f32.partialorder %v643, -0.87758255
    %vm764 = vcmp.gt.f32.partialorder %v644, -0.87758255
    %vm765 = vcmp.gt.f32.partialorder %v645, -0.87758255
    %vm766 = vcmp.gt.f32.partialorder %v646, -0.87758255
    %vm767 = vcmp.gt.f32.partialorder %v647, -0.87758255
    %vm768 = vcmp.gt.f32.partialorder %v648, -0.87758255
    %v769 = vsub.f32 %v641, 0.23971277
    %v770 = vsub.f32 %v642, 0.23971277
    %v771 = vsub.f32 %v643, 0.23971277
    %v772 = vsub.f32 %v644, 0.23971277
    %v773 = vsub.f32 %v645, 0.23971277
    %v774 = vsub.f32 %v646, 0.23971277
    %v775 = vsub.f32 %v647, 0.23971277
    %v776 = vsub.f32 %v648, 0.23971277
    %v777 = vsel %vm761, %v753, %v769
    %v778 = vsel %vm762, %v754, %v770
    %v779 = vsel %vm763, %v755, %v771
    %v780 = vsel %vm764, %v756, %v772
    %v781 = vsel %vm765, %v757, %v773
    %v782 = vsel %vm766, %v758, %v774
    %v783 = vsel %vm767, %v759, %v775
    %v784 = vsel %vm768, %v760, %v776
    %s785 = smul.u32 0, 1024
    %v786 = vlaneseq
    %v787 = vand.u32 %v786, 127
    %v788 = vadd.s32 %v787, 128
    %v789 = vadd.s32 %v787, 256
    %v790 = vadd.s32 %v787, 384
    %v791 = vadd.s32 %v787, 512
    %v792 = vadd.s32 %v787, 640
    %v793 = vadd.s32 %v787, 768
    %v794 = vadd.s32 %v787, 896
    %v795 = vstv %s785
    %v796 = vadd.s32 %v795, %v787
    %v797 = vadd.s32 %v795, %v788
    %v798 = vadd.s32 %v795, %v789
    %v799 = vadd.s32 %v795, %v790
    %v800 = vadd.s32 %v795, %v791
    %v801 = vadd.s32 %v795, %v792
    %v802 = vadd.s32 %v795, %v793
    %v803 = vadd.s32 %v795, %v794
    %v804 = vld [vmem:[%s4] sm:$0xff]
    %805 = vset.pattern.permute.xlu0 0
    %806 = vperm.xlu0 %805, %v804
    %v807 = vpop.permute.xlu0 %806
    %vm808 = vcmp.eq.s32.totalorder %v796, %v807
    %vm809 = vcmp.eq.s32.totalorder %v797, %v807
    %vm810 = vcmp.eq.s32.totalorder %v798, %v807
    %vm811 = vcmp.eq.s32.totalorder %v799, %v807
    %vm812 = vcmp.eq.s32.totalorder %v800, %v807
    %vm813 = vcmp.eq.s32.totalorder %v801, %v807
    %vm814 = vcmp.eq.s32.totalorder %v802, %v807
    %vm815 = vcmp.eq.s32.totalorder %v803, %v807
    %v816 = vsel %vm808, %v777, %v641
    %v817 = vsel %vm809, %v778, %v642
    %v818 = vsel %vm810, %v779, %v643
    %v819 = vsel %vm811, %v780, %v644
    %v820 = vsel %vm812, %v781, %v645
    %v821 = vsel %vm813, %v782, %v646
    %v822 = vsel %vm814, %v783, %v647
    %v823 = vsel %vm815, %v784, %v648
    %v824 = vmul.f32 %v816, 32.0
    %v825 = vmul.f32 %v817, 32.0
    %v826 = vmul.f32 %v818, 32.0
    %v827 = vmul.f32 %v819, 32.0
    %v828 = vmul.f32 %v820, 32.0
    %v829 = vmul.f32 %v821, 32.0
    %v830 = vmul.f32 %v822, 32.0
    %v831 = vmul.f32 %v823, 32.0
    %832 = vst [vmem:[#allocation5] sm:$0xff] %v824
    %833 = vst [vmem:[#allocation5 + $0x8] sm:$0xff] %v825
    %834 = vst [vmem:[#allocation5 + $0x10] sm:$0xff] %v826
    %835 = vst [vmem:[#allocation5 + $0x18] sm:$0xff] %v827
    %836 = vst [vmem:[#allocation5 + $0x20] sm:$0xff] %v828
    %837 = vst [vmem:[#allocation5 + $0x28] sm:$0xff] %v829
    %838 = vst [vmem:[#allocation5 + $0x30] sm:$0xff] %v830
    %839 = vst [vmem:[#allocation5 + $0x38] sm:$0xff] %v831
    // Predicated region
    $region26: #{tpu_custom_call.1} parent=1 // pred_check
      _
    $region27: #{tpu_custom_call.1} parent=1 // pred_check_branch
      %841 = sbr.rel (0) target = $region29
    $region28: #{tpu_custom_call.1} parent=1 // pred_region
      %s843 = ssub.s32 1024, 1024
      %844 = vsyncadd [#allocation4], %s843
      %s846 = sshll.u32 [#allocation5], 4
      %s847 = int_to_ptr.vmem [resolvable:$true] %s846
      %849 = dma.vmem_to_hbm [thread:$0]  %s847, 1024, %s5, [#allocation4]
    $region29: #{tpu_custom_call.1} parent=1 // pred_fallthru
      _
    // Predicated region
    $region30: #{tpu_custom_call.1} parent=1 // pred_check
      _
    $region31: #{tpu_custom_call.1} parent=1 // pred_check_branch
      %851 = sbr.rel (0) target = $region33
    $region32: #{tpu_custom_call.1} parent=1 // pred_region
      %852 = dma.done [#allocation4], 1024
    $region33: #{tpu_custom_call.1} parent=1 // pred_fallthru
      _
    %853 = vsyncpa [#allocation3], 1
    %854 = vsyncpa [#allocation4], 1

</llo_original>
